<compile_context>
chip_gen: v5e
topology: v5e:2x2
jax: 0.10.0
libtpu: 0.0.40
codegen_flags: <defaults>
</compile_context>

<pallas_src>
import jax
import jax.numpy as jnp
from jax import lax
from jax.experimental import pallas as pl
from jax.experimental.pallas import tpu as pltpu

ALPHA = 1.0
GAMMA = 2.0  # fixed at 2 -> explicit square below
LANE = 128


def focal_loss_kernel(logits_ref, targets_ref, out_ref):
    # logits_ref: (TN, C) input dtype; targets_ref: (1, TN) int32;
    # out_ref: (1, TN) f32 (lane-dense per-sample loss).
    logits = logits_ref[...].astype(jnp.float32)
    tn, c = logits.shape

    # Lane-dense targets -> (TN, 1) column via one small XLU transpose.
    tgt_col = jnp.transpose(targets_ref[...])                       # (TN, 1)

    # Numerically-stable softmax cross entropy; the row-max cancels out of ce.
    m = jnp.max(logits, axis=-1, keepdims=True)                     # (TN, 1)
    shifted = logits - m                                            # (TN, C)
    sum_exp = jnp.sum(jnp.exp(shifted), axis=-1)                    # (TN,)

    # Gather the target-class (shifted) logit via fused iota-compare / select
    # / reduce (no dynamic gather on TPU; no separately named bool tile).
    shifted_t = jnp.sum(
        jnp.where(lax.broadcasted_iota(jnp.int32, (tn, c), 1) == tgt_col,
                  shifted, 0.0),
        axis=-1)                                                    # (TN,)

    # Per-sample CE == F.cross_entropy(..., reduction='none').
    ce = jnp.log(sum_exp) - shifted_t                               # (TN,)
    pt = jnp.exp(-ce)
    one_minus_pt = 1.0 - pt
    focal = ALPHA * (one_minus_pt * one_minus_pt) * ce              # gamma == 2
    out_ref[...] = focal[None, :]                                   # (1, TN) lane-dense store


def _round_up(x, m):
    return -(-x // m) * m


def _vmem_limit_bytes():
    """Generation-aware scoped-VMEM limit (v5e/v6e ~76 MiB, v7x ~38 MiB)."""
    mib = 1024 * 1024
    try:
        cap = int(pltpu.get_tpu_info().vmem_capacity_bytes)
    except Exception:  # conservative fallback: assume v7x-sized 64 MiB / core
        cap = 64 * mib
    return int(min(96 * mib, max(32 * mib, (cap * 6) // 10)))


def _choose_row_tile(n, c, in_dtype, vmem_limit):
    """Pick a row tile (multiple of 128) against the per-step VMEM footprint."""
    in_bytes = jnp.dtype(in_dtype).itemsize
    # Per-row cost of one grid step: double-buffered input block plus ~6
    # full-width (TN, C) f32 intermediates (upcast, shifted, exp, iota, mask,
    # select) plus the lane-dense target/output blocks; target <= ~50% of the
    # scoped VMEM limit so headroom remains for compiler scratch.
    per_row = 2 * c * in_bytes + 6 * c * 4 + 64
    max_rows = max(LANE, ((vmem_limit // 2) // per_row) // LANE * LANE)

    # v7x megacore: the "parallel" grid axis only shards across the 2 TCs if
    # there are >= 2 grid steps, so cap the tile near half the batch.
    if n > LANE:
        max_rows = min(max_rows, _round_up(-(-n // 2), LANE))

    # No point in a tile larger than the lane-padded batch.
    return min(max_rows, _round_up(n, LANE))


def focal_loss(logits, targets, reduction="mean", row_tile=None):
    """logits: (N, C) float (f32/bf16); targets: (N,) int. Focal loss (mean by default)."""
    n, c = logits.shape
    vmem_limit = _vmem_limit_bytes()
    if row_tile is None:
        tn = _choose_row_tile(n, c, logits.dtype, vmem_limit)
    else:
        if row_tile <= 0 or row_tile % LANE != 0:
            raise ValueError("row_tile must be a positive multiple of 128")
        tn = row_tile

    num_blocks = pl.cdiv(n, tn)
    n_pad = num_blocks * tn
    grid = (num_blocks,)

    # Targets: lane-dense (num_blocks, TN) int32 (pad is class 0; padded rows
    # are sliced off before the reduction, so they never affect the result).
    tgt = targets.astype(jnp.int32).reshape(-1)
    if n_pad != n:
        tgt = jnp.concatenate([tgt, jnp.zeros((n_pad - n,), jnp.int32)], axis=0)
    tgt2d = tgt.reshape(num_blocks, tn)

    # Logits: only pad when a single block exceeds the whole batch (tiny N);
    # otherwise rely on Pallas' ragged last-block handling (no HBM copy).
    if tn > n:
        logits_in = jnp.concatenate(
            [logits, jnp.zeros((tn - n, c), logits.dtype)], axis=0)
    else:
        logits_in = logits

    itemsize = jnp.dtype(logits.dtype).itemsize
    cost = pl.CostEstimate(
        flops=8 * n * c,
        transcendentals=n * c + 3 * n,
        bytes_accessed=n * c * itemsize + n_pad * 4 + n_pad * 4,
    )

    per_sample = pl.pallas_call(
        focal_loss_kernel,
        out_shape=jax.ShapeDtypeStruct((num_blocks, tn), jnp.float32),
        grid=grid,
        in_specs=[
            pl.BlockSpec((tn, c), lambda i: (i, 0)),
            pl.BlockSpec((1, tn), lambda i: (i, 0)),
        ],
        out_specs=pl.BlockSpec((1, tn), lambda i: (i, 0)),
        compiler_params=pltpu.CompilerParams(
            dimension_semantics=("parallel",),
            vmem_limit_bytes=vmem_limit,
        ),
        cost_estimate=cost,
    )(logits_in, tgt2d)

    # Back to exactly N samples before the reduction (drops padded lanes).
    per_sample = per_sample.reshape(n_pad)[:n]
    if reduction == "mean":
        return jnp.mean(per_sample)
    elif reduction == "sum":
        return jnp.sum(per_sample)
    return per_sample


def focal_loss_ref(logits, targets):
    # Pure-JAX reference for sanity checking.
    logits = logits.astype(jnp.float32)
    lse = jax.nn.logsumexp(logits, axis=-1)
    logit_t = jnp.take_along_axis(logits, targets[:, None], axis=-1)[:, 0]
    ce = lse - logit_t
    pt = jnp.exp(-ce)
    return jnp.mean(ALPHA * (1.0 - pt) ** GAMMA * ce)


if __name__ == "__main__":
    key = jax.random.PRNGKey(0)
    k1, k2, k3, k4 = jax.random.split(key, 4)

    # Case 1: small f32 batch (padded to one 128-row lane-dense block, grid=1).
    N1, C1 = 16, 32
    logits1 = jax.random.normal(k1, (N1, C1), dtype=jnp.float32)
    targets1 = jax.random.randint(k2, (N1,), 0, C1, dtype=jnp.int32)
    loss1 = focal_loss(logits1, targets1)
    jax.block_until_ready(loss1)
    ref1 = focal_loss_ref(logits1, targets1)
    assert jnp.allclose(loss1, ref1, rtol=1e-5, atol=1e-5), (loss1, ref1)

    # Case 2: bf16 logits, N=300 with forced 128-row tile -> 3 grid steps,
    # ragged last input block, lane-dense output sliced back to exactly N.
    N2, C2 = 300, 48
    logits2 = jax.random.normal(k3, (N2, C2), dtype=jnp.float32).astype(jnp.bfloat16)
    targets2 = jax.random.randint(k4, (N2,), 0, C2, dtype=jnp.int32)
    loss2 = focal_loss(logits2, targets2, row_tile=128)
    jax.block_until_ready(loss2)
    ref2 = focal_loss_ref(logits2, targets2)
    assert jnp.allclose(loss2, ref2, rtol=1e-4, atol=1e-4), (loss2, ref2)

    print("KERNEL_OK")
</pallas_src>

<mosaic_0001>
module attributes {stable_mosaic.version = 11 : i64} {
  func.func @focal_loss_kernel(%arg0: i32, %arg1: memref<128x32xf32, #tpu.memory_space<vmem>>, %arg2: memref<1x128xi32, #tpu.memory_space<vmem>>, %arg3: memref<1x128xf32, #tpu.memory_space<vmem>>) attributes {dimension_semantics = [#tpu.dimension_semantics<parallel>], iteration_bounds = array<i64: 1>, scalar_prefetch = 0 : i64, scratch_operands = 0 : i64, tpu.core_type = #tpu.core_type<tc>, window_params = [{transform_indices = @transform_0, window_bounds = array<i64: 128, 32>}, {transform_indices = @transform_1, window_bounds = array<i64: 1, 128>}, {transform_indices = @transform_2, window_bounds = array<i64: 1, 128>}]} {
    %c0 = arith.constant 0 : index
    %c0_0 = arith.constant 0 : index
    %0 = vector.load %arg1[%c0, %c0_0] : memref<128x32xf32, #tpu.memory_space<vmem>>, vector<128x32xf32>
    %c0_1 = arith.constant 0 : index
    %c0_2 = arith.constant 0 : index
    %1 = vector.load %arg2[%c0_1, %c0_2] : memref<1x128xi32, #tpu.memory_space<vmem>>, vector<1x128xi32>
    %2 = tpu.transpose %1, [1, 0] : vector<1x128xi32> -> vector<128x1xi32>
    %cst = arith.constant dense<0xFF800000> : vector<128xf32>
    %3 = vector.multi_reduction <maximumf>, %0, %cst [1] : vector<128x32xf32> to vector<128xf32>
    %4 = vector.shape_cast %3 : vector<128xf32> to vector<128x1xf32>
    %5 = vector.broadcast %4 : vector<128x1xf32> to vector<128x32xf32>
    %6 = arith.subf %0, %5 : vector<128x32xf32>
    %7 = math.exp %6 : vector<128x32xf32>
    %cst_3 = arith.constant dense<0.000000e+00> : vector<128xf32>
    %8 = vector.multi_reduction <add>, %7, %cst_3 [1] : vector<128x32xf32> to vector<128xf32>
    %9 = tpu.iota {dimensions = array<i32: 1>} : vector<128x32xi32>
    %10 = vector.broadcast %2 : vector<128x1xi32> to vector<128x32xi32>
    %11 = arith.cmpi eq, %9, %10 : vector<128x32xi32>
    %cst_4 = arith.constant 0.000000e+00 : f32
    %12 = vector.broadcast %cst_4 : f32 to vector<128x32xf32>
    %13 = arith.select %11, %6, %12 : vector<128x32xi1>, vector<128x32xf32>
    %cst_5 = arith.constant dense<0.000000e+00> : vector<128xf32>
    %14 = vector.multi_reduction <add>, %13, %cst_5 [1] : vector<128x32xf32> to vector<128xf32>
    %15 = math.log %8 : vector<128xf32>
    %16 = arith.subf %15, %14 : vector<128xf32>
    %cst_6 = arith.constant 0.000000e+00 : f32
    %17 = vector.broadcast %cst_6 : f32 to vector<128xf32>
    %18 = arith.subf %17, %16 : vector<128xf32>
    %19 = math.exp %18 : vector<128xf32>
    %cst_7 = arith.constant 1.000000e+00 : f32
    %20 = vector.broadcast %cst_7 : f32 to vector<128xf32>
    %21 = arith.subf %20, %19 : vector<128xf32>
    %22 = arith.mulf %21, %21 : vector<128xf32>
    %cst_8 = arith.constant 1.000000e+00 : f32
    %23 = vector.broadcast %cst_8 : f32 to vector<128xf32>
    %24 = arith.mulf %23, %22 : vector<128xf32>
    %25 = arith.mulf %24, %16 : vector<128xf32>
    %26 = vector.shape_cast %25 : vector<128xf32> to vector<1x128xf32>
    %c0_9 = arith.constant 0 : index
    %c0_10 = arith.constant 0 : index
    %27 = vector.load %arg3[%c0_9, %c0_10] : memref<1x128xf32, #tpu.memory_space<vmem>>, vector<1x128xf32>
    tpu.vector_store %arg3[%c0_9, %c0_10], %26 {strides = array<i32>} : memref<1x128xf32, #tpu.memory_space<vmem>>, vector<1x128xf32>,
    return
  }
  func.func @transform_0(%arg0: i32) -> (i32, i32) {
    %c0_i32 = arith.constant 0 : i32
    %c0_i32_0 = arith.constant 0 : i32
    return %arg0, %c0_i32 : i32, i32
  }
  func.func @transform_1(%arg0: i32) -> (i32, i32) {
    %c0_i32 = arith.constant 0 : i32
    %c0_i32_0 = arith.constant 0 : i32
    return %arg0, %c0_i32 : i32, i32
  }
  func.func @transform_2(%arg0: i32) -> (i32, i32) {
    %c0_i32 = arith.constant 0 : i32
    %c0_i32_0 = arith.constant 0 : i32
    return %arg0, %c0_i32 : i32, i32
  }
}

</mosaic_0001>

<llo_original>
// kernel: tpu_custom_call.1
$region0: #{tpu_custom_call.1}
  #allocation0 [shape = 'u32[]', space=smem, size = 0x4, offset = 0x4, fixed_abs, tag = 'smem constant byte address 0x4 - core index']
  #allocation1 [shape = 'u32[72,128]{1,0:T(1,128)}', space=vmem, size = 0x9000, scoped, tag = 'internal scratch']
  %s0 = inlined_call_operand.vmem [shape: f32[128,32], index: 0, kind: input, shape index: {}]
  %s1 = inlined_call_operand.vmem [shape: s32[1,128], index: 1, kind: input, shape index: {}]
  %s2 = inlined_call_operand.hbm [shape: f32[1,128], index: 2, kind: output, shape index: {}]
  %s3 = sld [smem:[#allocation0]]
  $region18: #{tpu_custom_call.1} parent=0
    _
  %s5 = ssub.s32 1, %s3
  %s6 = scalar_select 0, %s5, %s3
  $region1: #{tpu_custom_call.1} parent=0
    #allocation2 [shape = 'u8[512]{0}', space=vmem, size = 0x400, scoped, tag = 'output window, operand 0, single buffered']
    #allocation3 [shape = 's32[1]{0}', space=sflag, size = 0x4, scoped, tag = 'scoped memory for tpu_custom_call.1']
    %7 = vsyncpa [#allocation3], 0
    // Predicated region
    $region2: #{tpu_custom_call.1} parent=1 // pred_check
      _
    $region3: #{tpu_custom_call.1} parent=1 // pred_check_branch
      %9 = sbr.rel (0) target = $region5
    $region4: #{tpu_custom_call.1} parent=1 // pred_region
      _
    $region5: #{tpu_custom_call.1} parent=1 // pred_fallthru
      _
    // Predicated region
    $region6: #{tpu_custom_call.1} parent=1 // pred_check
      _
    $region7: #{tpu_custom_call.1} parent=1 // pred_check_branch
      %11 = sbr.rel (0) target = $region9
    $region8: #{tpu_custom_call.1} parent=1 // pred_region
      _
    $region9: #{tpu_custom_call.1} parent=1 // pred_fallthru
      _
    %v12 = vld [vmem:[%s0] sm:$0xff]
    %v13 = vld [vmem:[%s0 + $0x8] sm:$0xff]
    %v14 = vld [vmem:[%s0 + $0x10] sm:$0xff]
    %v15 = vld [vmem:[%s0 + $0x18] sm:$0xff]
    %v16 = vld [vmem:[%s0 + $0x20] sm:$0xff]
    %v17 = vld [vmem:[%s0 + $0x28] sm:$0xff]
    %v18 = vld [vmem:[%s0 + $0x30] sm:$0xff]
    %v19 = vld [vmem:[%s0 + $0x38] sm:$0xff]
    %v20 = vld [vmem:[%s0 + $0x40] sm:$0xff]
    %v21 = vld [vmem:[%s0 + $0x48] sm:$0xff]
    %v22 = vld [vmem:[%s0 + $0x50] sm:$0xff]
    %v23 = vld [vmem:[%s0 + $0x58] sm:$0xff]
    %v24 = vld [vmem:[%s0 + $0x60] sm:$0xff]
    %v25 = vld [vmem:[%s0 + $0x68] sm:$0xff]
    %v26 = vld [vmem:[%s0 + $0x70] sm:$0xff]
    %v27 = vld [vmem:[%s0 + $0x78] sm:$0xff]
    %v28 = vld [vmem:[%s1] sm:$0x1]
    %29 = vxpose.xlu0.b32.start [1/16] %v28, 128
    %30 = vxpose.xlu0.b32.cont [2/16] 0, 128
    %31 = vxpose.xlu0.b32.cont [3/16] 0, 128
    %32 = vxpose.xlu0.b32.cont [4/16] 0, 128
    %33 = vxpose.xlu0.b32.cont [5/16] 0, 128
    %34 = vxpose.xlu0.b32.cont [6/16] 0, 128
    %35 = vxpose.xlu0.b32.cont [7/16] 0, 128
    %36 = vxpose.xlu0.b32.cont [8/16] 0, 128
    %37 = vxpose.xlu0.b32.cont [9/16] 0, 128
    %38 = vxpose.xlu0.b32.cont [10/16] 0, 128
    %39 = vxpose.xlu0.b32.cont [11/16] 0, 128
    %40 = vxpose.xlu0.b32.cont [12/16] 0, 128
    %41 = vxpose.xlu0.b32.cont [13/16] 0, 128
    %42 = vxpose.xlu0.b32.cont [14/16] 0, 128
    %43 = vxpose.xlu0.b32.cont [15/16] 0, 128
    %44 = vxpose.xlu0.b32.end [16/16] 0, 128
    %v45 = vpop.trf.xlu0
    %v46 = vpop.trf.xlu0
    %v47 = vpop.trf.xlu0
    %v48 = vpop.trf.xlu0
    %v49 = vpop.trf.xlu0
    %v50 = vpop.trf.xlu0
    %v51 = vpop.trf.xlu0
    %v52 = vpop.trf.xlu0
    %v53 = vpop.trf.xlu0
    %v54 = vpop.trf.xlu0
    %v55 = vpop.trf.xlu0
    %v56 = vpop.trf.xlu0
    %v57 = vpop.trf.xlu0
    %v58 = vpop.trf.xlu0
    %v59 = vpop.trf.xlu0
    %v60 = vpop.trf.xlu0
    %vm61 = vcmask 261120
    %v62 = vsel %vm61, %v12, -inf
    %63 = vmax.xlane.f32.xlu0 %v62
    %v64 = vpop.xlane.xlu0 %63
    %v65 = vsel %vm61, %v13, -inf
    %66 = vmax.xlane.f32.xlu0 %v65
    %v67 = vpop.xlane.xlu0 %66
    %v68 = vsel %vm61, %v14, -inf
    %69 = vmax.xlane.f32.xlu0 %v68
    %v70 = vpop.xlane.xlu0 %69
    %v71 = vsel %vm61, %v15, -inf
    %72 = vmax.xlane.f32.xlu0 %v71
    %v73 = vpop.xlane.xlu0 %72
    %v74 = vsel %vm61, %v16, -inf
    %75 = vmax.xlane.f32.xlu0 %v74
    %v76 = vpop.xlane.xlu0 %75
    %v77 = vsel %vm61, %v17, -inf
    %78 = vmax.xlane.f32.xlu0 %v77
    %v79 = vpop.xlane.xlu0 %78
    %v80 = vsel %vm61, %v18, -inf
    %81 = vmax.xlane.f32.xlu0 %v80
    %v82 = vpop.xlane.xlu0 %81
    %v83 = vsel %vm61, %v19, -inf
    %84 = vmax.xlane.f32.xlu0 %v83
    %v85 = vpop.xlane.xlu0 %84
    %v86 = vsel %vm61, %v20, -inf
    %87 = vmax.xlane.f32.xlu0 %v86
    %v88 = vpop.xlane.xlu0 %87
    %v89 = vsel %vm61, %v21, -inf
    %90 = vmax.xlane.f32.xlu0 %v89
    %v91 = vpop.xlane.xlu0 %90
    %v92 = vsel %vm61, %v22, -inf
    %93 = vmax.xlane.f32.xlu0 %v92
    %v94 = vpop.xlane.xlu0 %93
    %v95 = vsel %vm61, %v23, -inf
    %96 = vmax.xlane.f32.xlu0 %v95
    %v97 = vpop.xlane.xlu0 %96
    %v98 = vsel %vm61, %v24, -inf
    %99 = vmax.xlane.f32.xlu0 %v98
    %v100 = vpop.xlane.xlu0 %99
    %v101 = vsel %vm61, %v25, -inf
    %102 = vmax.xlane.f32.xlu0 %v101
    %v103 = vpop.xlane.xlu0 %102
    %v104 = vsel %vm61, %v26, -inf
    %105 = vmax.xlane.f32.xlu0 %v104
    %v106 = vpop.xlane.xlu0 %105
    %v107 = vsel %vm61, %v27, -inf
    %108 = vmax.xlane.f32.xlu0 %v107
    %v109 = vpop.xlane.xlu0 %108
    %v110 = vsub.f32 %v12, %v64
    %v111 = vsub.f32 %v13, %v67
    %v112 = vsub.f32 %v14, %v70
    %v113 = vsub.f32 %v15, %v73
    %v114 = vsub.f32 %v16, %v76
    %v115 = vsub.f32 %v17, %v79
    %v116 = vsub.f32 %v18, %v82
    %v117 = vsub.f32 %v19, %v85
    %v118 = vsub.f32 %v20, %v88
    %v119 = vsub.f32 %v21, %v91
    %v120 = vsub.f32 %v22, %v94
    %v121 = vsub.f32 %v23, %v97
    %v122 = vsub.f32 %v24, %v100
    %v123 = vsub.f32 %v25, %v103
    %v124 = vsub.f32 %v26, %v106
    %v125 = vsub.f32 %v27, %v109
    %v126 = vmul.f32 %v110, 1.442695
    %v127 = vpow.pop %v126
    %v128 = vmul.f32 %v111, 1.442695
    %v129 = vpow.pop %v128
    %v130 = vmul.f32 %v112, 1.442695
    %v131 = vpow.pop %v130
    %v132 = vmul.f32 %v113, 1.442695
    %v133 = vpow.pop %v132
    %v134 = vmul.f32 %v114, 1.442695
    %v135 = vpow.pop %v134
    %v136 = vmul.f32 %v115, 1.442695
    %v137 = vpow.pop %v136
    %v138 = vmul.f32 %v116, 1.442695
    %v139 = vpow.pop %v138
    %v140 = vmul.f32 %v117, 1.442695
    %v141 = vpow.pop %v140
    %v142 = vmul.f32 %v118, 1.442695
    %v143 = vpow.pop %v142
    %v144 = vmul.f32 %v119, 1.442695
    %v145 = vpow.pop %v144
    %v146 = vmul.f32 %v120, 1.442695
    %v147 = vpow.pop %v146
    %v148 = vmul.f32 %v121, 1.442695
    %v149 = vpow.pop %v148
    %v150 = vmul.f32 %v122, 1.442695
    %v151 = vpow.pop %v150
    %v152 = vmul.f32 %v123, 1.442695
    %v153 = vpow.pop %v152
    %v154 = vmul.f32 %v124, 1.442695
    %v155 = vpow.pop %v154
    %v156 = vmul.f32 %v125, 1.442695
    %v157 = vpow.pop %v156
    %v158 = vsel %vm61, %v127, 0.0
    %159 = vadd.xlane.f32.xlu0 %v158
    %v160 = vpop.xlane.xlu0 %159
    %v161 = vsel %vm61, %v129, 0.0
    %162 = vadd.xlane.f32.xlu0 %v161
    %v163 = vpop.xlane.xlu0 %162
    %v164 = vsel %vm61, %v131, 0.0
    %165 = vadd.xlane.f32.xlu0 %v164
    %v166 = vpop.xlane.xlu0 %165
    %v167 = vsel %vm61, %v133, 0.0
    %168 = vadd.xlane.f32.xlu0 %v167
    %v169 = vpop.xlane.xlu0 %168
    %v170 = vsel %vm61, %v135, 0.0
    %171 = vadd.xlane.f32.xlu0 %v170
    %v172 = vpop.xlane.xlu0 %171
    %v173 = vsel %vm61, %v137, 0.0
    %174 = vadd.xlane.f32.xlu0 %v173
    %v175 = vpop.xlane.xlu0 %174
    %v176 = vsel %vm61, %v139, 0.0
    %177 = vadd.xlane.f32.xlu0 %v176
    %v178 = vpop.xlane.xlu0 %177
    %v179 = vsel %vm61, %v141, 0.0
    %180 = vadd.xlane.f32.xlu0 %v179
    %v181 = vpop.xlane.xlu0 %180
    %v182 = vsel %vm61, %v143, 0.0
    %183 = vadd.xlane.f32.xlu0 %v182
    %v184 = vpop.xlane.xlu0 %183
    %v185 = vsel %vm61, %v145, 0.0
    %186 = vadd.xlane.f32.xlu0 %v185
    %v187 = vpop.xlane.xlu0 %186
    %v188 = vsel %vm61, %v147, 0.0
    %189 = vadd.xlane.f32.xlu0 %v188
    %v190 = vpop.xlane.xlu0 %189
    %v191 = vsel %vm61, %v149, 0.0
    %192 = vadd.xlane.f32.xlu0 %v191
    %v193 = vpop.xlane.xlu0 %192
    %v194 = vsel %vm61, %v151, 0.0
    %195 = vadd.xlane.f32.xlu0 %v194
    %v196 = vpop.xlane.xlu0 %195
    %v197 = vsel %vm61, %v153, 0.0
    %198 = vadd.xlane.f32.xlu0 %v197
    %v199 = vpop.xlane.xlu0 %198
    %v200 = vsel %vm61, %v155, 0.0
    %201 = vadd.xlane.f32.xlu0 %v200
    %v202 = vpop.xlane.xlu0 %201
    %v203 = vsel %vm61, %v157, 0.0
    %204 = vadd.xlane.f32.xlu0 %v203
    %v205 = vpop.xlane.xlu0 %204
    %v206 = vlaneseq
    %v207 = vand.u32 %v206, 127
    %208 = vset.pattern.permute.xlu0 0
    %209 = vperm.xlu0 %208, %v45
    %v210 = vpop.permute.xlu0 %209
    %211 = vset.pattern.permute.xlu0 0
    %212 = vperm.xlu0 %211, %v46
    %v213 = vpop.permute.xlu0 %212
    %214 = vset.pattern.permute.xlu0 0
    %215 = vperm.xlu0 %214, %v47
    %v216 = vpop.permute.xlu0 %215
    %217 = vset.pattern.permute.xlu0 0
    %218 = vperm.xlu0 %217, %v48
    %v219 = vpop.permute.xlu0 %218
    %220 = vset.pattern.permute.xlu0 0
    %221 = vperm.xlu0 %220, %v49
    %v222 = vpop.permute.xlu0 %221
    %223 = vset.pattern.permute.xlu0 0
    %224 = vperm.xlu0 %223, %v50
    %v225 = vpop.permute.xlu0 %224
    %226 = vset.pattern.permute.xlu0 0
    %227 = vperm.xlu0 %226, %v51
    %v228 = vpop.permute.xlu0 %227
    %229 = vset.pattern.permute.xlu0 0
    %230 = vperm.xlu0 %229, %v52
    %v231 = vpop.permute.xlu0 %230
    %232 = vset.pattern.permute.xlu0 0
    %233 = vperm.xlu0 %232, %v53
    %v234 = vpop.permute.xlu0 %233
    %235 = vset.pattern.permute.xlu0 0
    %236 = vperm.xlu0 %235, %v54
    %v237 = vpop.permute.xlu0 %236
    %238 = vset.pattern.permute.xlu0 0
    %239 = vperm.xlu0 %238, %v55
    %v240 = vpop.permute.xlu0 %239
    %241 = vset.pattern.permute.xlu0 0
    %242 = vperm.xlu0 %241, %v56
    %v243 = vpop.permute.xlu0 %242
    %244 = vset.pattern.permute.xlu0 0
    %245 = vperm.xlu0 %244, %v57
    %v246 = vpop.permute.xlu0 %245
    %247 = vset.pattern.permute.xlu0 0
    %248 = vperm.xlu0 %247, %v58
    %v249 = vpop.permute.xlu0 %248
    %250 = vset.pattern.permute.xlu0 0
    %251 = vperm.xlu0 %250, %v59
    %v252 = vpop.permute.xlu0 %251
    %253 = vset.pattern.permute.xlu0 0
    %254 = vperm.xlu0 %253, %v60
    %v255 = vpop.permute.xlu0 %254
    %vm256 = vcmp.eq.s32.totalorder %v207, %v210
    %vm257 = vcmp.eq.s32.totalorder %v207, %v213
    %vm258 = vcmp.eq.s32.totalorder %v207, %v216
    %vm259 = vcmp.eq.s32.totalorder %v207, %v219
    %vm260 = vcmp.eq.s32.totalorder %v207, %v222
    %vm261 = vcmp.eq.s32.totalorder %v207, %v225
    %vm262 = vcmp.eq.s32.totalorder %v207, %v228
    %vm263 = vcmp.eq.s32.totalorder %v207, %v231
    %vm264 = vcmp.eq.s32.totalorder %v207, %v234
    %vm265 = vcmp.eq.s32.totalorder %v207, %v237
    %vm266 = vcmp.eq.s32.totalorder %v207, %v240
    %vm267 = vcmp.eq.s32.totalorder %v207, %v243
    %vm268 = vcmp.eq.s32.totalorder %v207, %v246
    %vm269 = vcmp.eq.s32.totalorder %v207, %v249
    %vm270 = vcmp.eq.s32.totalorder %v207, %v252
    %vm271 = vcmp.eq.s32.totalorder %v207, %v255
    %v272 = vsel %vm256, %v110, 0.0
    %v273 = vsel %vm257, %v111, 0.0
    %v274 = vsel %vm258, %v112, 0.0
    %v275 = vsel %vm259, %v113, 0.0
    %v276 = vsel %vm260, %v114, 0.0
    %v277 = vsel %vm261, %v115, 0.0
    %v278 = vsel %vm262, %v116, 0.0
    %v279 = vsel %vm263, %v117, 0.0
    %v280 = vsel %vm264, %v118, 0.0
    %v281 = vsel %vm265, %v119, 0.0
    %v282 = vsel %vm266, %v120, 0.0
    %v283 = vsel %vm267, %v121, 0.0
    %v284 = vsel %vm268, %v122, 0.0
    %v285 = vsel %vm269, %v123, 0.0
    %v286 = vsel %vm270, %v124, 0.0
    %v287 = vsel %vm271, %v125, 0.0
    %v288 = vsel %vm61, %v272, 0.0
    %289 = vadd.xlane.f32.xlu0 %v288
    %v290 = vpop.xlane.xlu0 %289
    %v291 = vsel %vm61, %v273, 0.0
    %292 = vadd.xlane.f32.xlu0 %v291
    %v293 = vpop.xlane.xlu0 %292
    %v294 = vsel %vm61, %v274, 0.0
    %295 = vadd.xlane.f32.xlu0 %v294
    %v296 = vpop.xlane.xlu0 %295
    %v297 = vsel %vm61, %v275, 0.0
    %298 = vadd.xlane.f32.xlu0 %v297
    %v299 = vpop.xlane.xlu0 %298
    %v300 = vsel %vm61, %v276, 0.0
    %301 = vadd.xlane.f32.xlu0 %v300
    %v302 = vpop.xlane.xlu0 %301
    %v303 = vsel %vm61, %v277, 0.0
    %304 = vadd.xlane.f32.xlu0 %v303
    %v305 = vpop.xlane.xlu0 %304
    %v306 = vsel %vm61, %v278, 0.0
    %307 = vadd.xlane.f32.xlu0 %v306
    %v308 = vpop.xlane.xlu0 %307
    %v309 = vsel %vm61, %v279, 0.0
    %310 = vadd.xlane.f32.xlu0 %v309
    %v311 = vpop.xlane.xlu0 %310
    %v312 = vsel %vm61, %v280, 0.0
    %313 = vadd.xlane.f32.xlu0 %v312
    %v314 = vpop.xlane.xlu0 %313
    %v315 = vsel %vm61, %v281, 0.0
    %316 = vadd.xlane.f32.xlu0 %v315
    %v317 = vpop.xlane.xlu0 %316
    %v318 = vsel %vm61, %v282, 0.0
    %319 = vadd.xlane.f32.xlu0 %v318
    %v320 = vpop.xlane.xlu0 %319
    %v321 = vsel %vm61, %v283, 0.0
    %322 = vadd.xlane.f32.xlu0 %v321
    %v323 = vpop.xlane.xlu0 %322
    %v324 = vsel %vm61, %v284, 0.0
    %325 = vadd.xlane.f32.xlu0 %v324
    %v326 = vpop.xlane.xlu0 %325
    %v327 = vsel %vm61, %v285, 0.0
    %328 = vadd.xlane.f32.xlu0 %v327
    %v329 = vpop.xlane.xlu0 %328
    %v330 = vsel %vm61, %v286, 0.0
    %331 = vadd.xlane.f32.xlu0 %v330
    %v332 = vpop.xlane.xlu0 %331
    %v333 = vsel %vm61, %v287, 0.0
    %334 = vadd.xlane.f32.xlu0 %v333
    %v335 = vpop.xlane.xlu0 %334
    %v336 = vlog2.pop %v160
    %v337 = vmul.f32 %v336, 0.6931472
    %v338 = vlog2.pop %v163
    %v339 = vmul.f32 %v338, 0.6931472
    %v340 = vlog2.pop %v166
    %v341 = vmul.f32 %v340, 0.6931472
    %v342 = vlog2.pop %v169
    %v343 = vmul.f32 %v342, 0.6931472
    %v344 = vlog2.pop %v172
    %v345 = vmul.f32 %v344, 0.6931472
    %v346 = vlog2.pop %v175
    %v347 = vmul.f32 %v346, 0.6931472
    %v348 = vlog2.pop %v178
    %v349 = vmul.f32 %v348, 0.6931472
    %v350 = vlog2.pop %v181
    %v351 = vmul.f32 %v350, 0.6931472
    %v352 = vlog2.pop %v184
    %v353 = vmul.f32 %v352, 0.6931472
    %v354 = vlog2.pop %v187
    %v355 = vmul.f32 %v354, 0.6931472
    %v356 = vlog2.pop %v190
    %v357 = vmul.f32 %v356, 0.6931472
    %v358 = vlog2.pop %v193
    %v359 = vmul.f32 %v358, 0.6931472
    %v360 = vlog2.pop %v196
    %v361 = vmul.f32 %v360, 0.6931472
    %v362 = vlog2.pop %v199
    %v363 = vmul.f32 %v362, 0.6931472
    %v364 = vlog2.pop %v202
    %v365 = vmul.f32 %v364, 0.6931472
    %v366 = vlog2.pop %v205
    %v367 = vmul.f32 %v366, 0.6931472
    %v368 = vsub.f32 %v337, %v290
    %v369 = vsub.f32 %v339, %v293
    %v370 = vsub.f32 %v341, %v296
    %v371 = vsub.f32 %v343, %v299
    %v372 = vsub.f32 %v345, %v302
    %v373 = vsub.f32 %v347, %v305
    %v374 = vsub.f32 %v349, %v308
    %v375 = vsub.f32 %v351, %v311
    %v376 = vsub.f32 %v353, %v314
    %v377 = vsub.f32 %v355, %v317
    %v378 = vsub.f32 %v357, %v320
    %v379 = vsub.f32 %v359, %v323
    %v380 = vsub.f32 %v361, %v326
    %v381 = vsub.f32 %v363, %v329
    %v382 = vsub.f32 %v365, %v332
    %v383 = vsub.f32 %v367, %v335
    %v384 = vsub.f32 0.0, %v368
    %v385 = vsub.f32 0.0, %v369
    %v386 = vsub.f32 0.0, %v370
    %v387 = vsub.f32 0.0, %v371
    %v388 = vsub.f32 0.0, %v372
    %v389 = vsub.f32 0.0, %v373
    %v390 = vsub.f32 0.0, %v374
    %v391 = vsub.f32 0.0, %v375
    %v392 = vsub.f32 0.0, %v376
    %v393 = vsub.f32 0.0, %v377
    %v394 = vsub.f32 0.0, %v378
    %v395 = vsub.f32 0.0, %v379
    %v396 = vsub.f32 0.0, %v380
    %v397 = vsub.f32 0.0, %v381
    %v398 = vsub.f32 0.0, %v382
    %v399 = vsub.f32 0.0, %v383
    %v400 = vmul.f32 %v384, 1.442695
    %v401 = vpow.pop %v400
    %v402 = vmul.f32 %v385, 1.442695
    %v403 = vpow.pop %v402
    %v404 = vmul.f32 %v386, 1.442695
    %v405 = vpow.pop %v404
    %v406 = vmul.f32 %v387, 1.442695
    %v407 = vpow.pop %v406
    %v408 = vmul.f32 %v388, 1.442695
    %v409 = vpow.pop %v408
    %v410 = vmul.f32 %v389, 1.442695
    %v411 = vpow.pop %v410
    %v412 = vmul.f32 %v390, 1.442695
    %v413 = vpow.pop %v412
    %v414 = vmul.f32 %v391, 1.442695
    %v415 = vpow.pop %v414
    %v416 = vmul.f32 %v392, 1.442695
    %v417 = vpow.pop %v416
    %v418 = vmul.f32 %v393, 1.442695
    %v419 = vpow.pop %v418
    %v420 = vmul.f32 %v394, 1.442695
    %v421 = vpow.pop %v420
    %v422 = vmul.f32 %v395, 1.442695
    %v423 = vpow.pop %v422
    %v424 = vmul.f32 %v396, 1.442695
    %v425 = vpow.pop %v424
    %v426 = vmul.f32 %v397, 1.442695
    %v427 = vpow.pop %v426
    %v428 = vmul.f32 %v398, 1.442695
    %v429 = vpow.pop %v428
    %v430 = vmul.f32 %v399, 1.442695
    %v431 = vpow.pop %v430
    %v432 = vsub.f32 1.0, %v401
    %v433 = vsub.f32 1.0, %v403
    %v434 = vsub.f32 1.0, %v405
    %v435 = vsub.f32 1.0, %v407
    %v436 = vsub.f32 1.0, %v409
    %v437 = vsub.f32 1.0, %v411
    %v438 = vsub.f32 1.0, %v413
    %v439 = vsub.f32 1.0, %v415
    %v440 = vsub.f32 1.0, %v417
    %v441 = vsub.f32 1.0, %v419
    %v442 = vsub.f32 1.0, %v421
    %v443 = vsub.f32 1.0, %v423
    %v444 = vsub.f32 1.0, %v425
    %v445 = vsub.f32 1.0, %v427
    %v446 = vsub.f32 1.0, %v429
    %v447 = vsub.f32 1.0, %v431
    %v448 = vmul.f32 %v432, %v432
    %v449 = vmul.f32 %v433, %v433
    %v450 = vmul.f32 %v434, %v434
    %v451 = vmul.f32 %v435, %v435
    %v452 = vmul.f32 %v436, %v436
    %v453 = vmul.f32 %v437, %v437
    %v454 = vmul.f32 %v438, %v438
    %v455 = vmul.f32 %v439, %v439
    %v456 = vmul.f32 %v440, %v440
    %v457 = vmul.f32 %v441, %v441
    %v458 = vmul.f32 %v442, %v442
    %v459 = vmul.f32 %v443, %v443
    %v460 = vmul.f32 %v444, %v444
    %v461 = vmul.f32 %v445, %v445
    %v462 = vmul.f32 %v446, %v446
    %v463 = vmul.f32 %v447, %v447
    %v464 = vmul.f32 %v448, %v368
    %v465 = vmul.f32 %v449, %v369
    %v466 = vmul.f32 %v450, %v370
    %v467 = vmul.f32 %v451, %v371
    %v468 = vmul.f32 %v452, %v372
    %v469 = vmul.f32 %v453, %v373
    %v470 = vmul.f32 %v454, %v374
    %v471 = vmul.f32 %v455, %v375
    %v472 = vmul.f32 %v456, %v376
    %v473 = vmul.f32 %v457, %v377
    %v474 = vmul.f32 %v458, %v378
    %v475 = vmul.f32 %v459, %v379
    %v476 = vmul.f32 %v460, %v380
    %v477 = vmul.f32 %v461, %v381
    %v478 = vmul.f32 %v462, %v382
    %v479 = vmul.f32 %v463, %v383
    %v496 = vperm.slane %v464, %v207
    %v497 = vadd.s32 %v207, 4294967288
    %v498 = vperm.slane %v465, %v497
    %vm499 = vcmask 130112
    %v500 = vsel %vm499, %v498, %v496
    %v501 = vadd.s32 %v207, 4294967280
    %v502 = vperm.slane %v466, %v501
    %vm503 = vcmask 195712
    %v504 = vsel %vm503, %v502, %v500
    %v505 = vadd.s32 %v207, 4294967272
    %v506 = vperm.slane %v467, %v505
    %vm507 = vcmask 261312
    %v508 = vsel %vm507, %v506, %v504
    %v509 = vadd.s32 %v207, 4294967264
    %v510 = vperm.slane %v468, %v509
    %vm511 = vcmask 326912
    %v512 = vsel %vm511, %v510, %v508
    %v513 = vadd.s32 %v207, 4294967256
    %v514 = vperm.slane %v469, %v513
    %vm515 = vcmask 392512
    %v516 = vsel %vm515, %v514, %v512
    %v517 = vadd.s32 %v207, 4294967248
    %v518 = vperm.slane %v470, %v517
    %vm519 = vcmask 458112
    %v520 = vsel %vm519, %v518, %v516
    %v521 = vadd.s32 %v207, 4294967240
    %v522 = vperm.slane %v471, %v521
    %vm523 = vcmask 523712
    %v524 = vsel %vm523, %v522, %v520
    %v525 = vadd.s32 %v207, 4294967232
    %v526 = vperm.slane %v472, %v525
    %vm527 = vcmask 589312
    %v528 = vsel %vm527, %v526, %v524
    %v529 = vadd.s32 %v207, 4294967224
    %v530 = vperm.slane %v473, %v529
    %vm531 = vcmask 654912
    %v532 = vsel %vm531, %v530, %v528
    %v533 = vadd.s32 %v207, 4294967216
    %v534 = vperm.slane %v474, %v533
    %vm535 = vcmask 720512
    %v536 = vsel %vm535, %v534, %v532
    %v537 = vadd.s32 %v207, 4294967208
    %v538 = vperm.slane %v475, %v537
    %vm539 = vcmask 786112
    %v540 = vsel %vm539, %v538, %v536
    %v541 = vadd.s32 %v207, 4294967200
    %v542 = vperm.slane %v476, %v541
    %vm543 = vcmask 851712
    %v544 = vsel %vm543, %v542, %v540
    %v545 = vadd.s32 %v207, 4294967192
    %v546 = vperm.slane %v477, %v545
    %vm547 = vcmask 917312
    %v548 = vsel %vm547, %v546, %v544
    %v549 = vadd.s32 %v207, 4294967184
    %v550 = vperm.slane %v478, %v549
    %vm551 = vcmask 982912
    %v552 = vsel %vm551, %v550, %v548
    %v553 = vadd.s32 %v207, 4294967176
    %v554 = vperm.slane %v479, %v553
    %vm555 = vcmask 1048512
    %v556 = vsel %vm555, %v554, %v552
    %558 = vst [vmem:[#allocation2] sm:$0x1] %v556
    // Predicated region
    $region10: #{tpu_custom_call.1} parent=1 // pred_check
      _
    $region11: #{tpu_custom_call.1} parent=1 // pred_check_branch
      %560 = sbr.rel (0) target = $region13
    $region12: #{tpu_custom_call.1} parent=1 // pred_region
      %562 = vsyncadd [#allocation3], 0
      %s564 = sshll.u32 [#allocation2], 4
      %s565 = int_to_ptr.vmem [resolvable:$true] %s564
      %s566 = sshll.u32 %s2, 4
      %s567 = int_to_ptr.hbm [resolvable:$true] %s566
      %569 = dma.vmem_to_hbm [thread:$0]  %s565, 16, %s567, [#allocation3]
    $region13: #{tpu_custom_call.1} parent=1 // pred_fallthru
      _
    // Predicated region
    $region14: #{tpu_custom_call.1} parent=1 // pred_check
      _
    $region15: #{tpu_custom_call.1} parent=1 // pred_check_branch
      %571 = sbr.rel (0) target = $region17
    $region16: #{tpu_custom_call.1} parent=1 // pred_region
      %573 = dma.done [#allocation3], 16
    $region17: #{tpu_custom_call.1} parent=1 // pred_fallthru
      _
    %574 = vsyncpa [#allocation3], 1

</llo_original>
